<compile_context>
chip_gen: v7x
topology: tpu7x:2x2x1
jax: 0.10.0
libtpu: 0.0.40
codegen_flags: <defaults>
</compile_context>

<pallas_src>
import functools

import jax
import jax.numpy as jnp
from jax.experimental import pallas as pl
from jax.experimental.pallas import tpu as pltpu


def _round_up(x, m):
    return (x + m - 1) // m * m


def _pad_and_tile(dim, mult, max_tile):
    """Pad `dim` to a tileable size and pick the tile size.

    Returns (padded_dim, tile): tile is a multiple of `mult` (or the full
    padded dim) and padded_dim is an exact multiple of tile.  `max_tile` must
    be a multiple of `mult`.
    """
    padded = _round_up(dim, mult)
    if padded <= max_tile:
        return padded, padded
    padded = _round_up(dim, max_tile)
    return padded, max_tile


# ---------------------------------------------------------------------------
# Kernels
# ---------------------------------------------------------------------------
def _conv_gemm_kernel(w_ref, p_ref, b_ref, o_ref, *, apply_relu):
    """Single-shot GEMM-conv block: the whole K*K*Cin contraction in one matmul.

    w_ref: (TCo, TKK)      bf16   weight panel (2-D repacked weight)
    p_ref: (1, TKK, THW)   bf16   im2col patch tile (reused across co steps)
    b_ref: (TCo, 1)        f32    bias (broadcast over lanes)
    o_ref: (1, TCo, THW)           lane-dense output tile
    """
    res = jnp.dot(w_ref[...], p_ref[0], preferred_element_type=jnp.float32)
    res = res + b_ref[...]
    if apply_relu:
        res = jnp.maximum(res, 0.0)
    o_ref[0] = res.astype(o_ref.dtype)


def _conv_gemm_kernel_kred(w_ref, p_ref, b_ref, o_ref, acc_ref, *, apply_relu):
    """Fallback for very large KKC: reduction over K tiles with a VMEM accumulator."""
    k = pl.program_id(3)

    @pl.when(k == 0)
    def _():
        acc_ref[...] = jnp.zeros_like(acc_ref)

    acc_ref[...] += jnp.dot(w_ref[...], p_ref[0],
                            preferred_element_type=jnp.float32)

    @pl.when(k == pl.num_programs(3) - 1)
    def _():
        res = acc_ref[...] + b_ref[...]
        if apply_relu:
            res = jnp.maximum(res, 0.0)
        o_ref[0] = res.astype(o_ref.dtype)


# ---------------------------------------------------------------------------
# Wrapper
# ---------------------------------------------------------------------------
def conv2d_pallas(x, weight, bias, *, stride=1, padding=0, relu=False,
                  compute_dtype=jnp.bfloat16, out_dtype=None,
                  tco_cap=512, thw_cap=1024, tkk_cap=4608):
    """y = [ReLU]( Conv2d(x; weight, bias, stride, padding) ), NCHW in / NCHW out.

    weight: (Cout, Cin, K, K) as in nn.Conv2d; groups=1, dilation=1 (all that
    Res_50 / ResNet-50 needs).  Set out_dtype=jnp.bfloat16 when the result
    feeds another conv/BN/ReLU to halve HBM writeback traffic.
    """
    N, Cin, H, W = x.shape
    Cout, Cin_w, K, K2 = weight.shape
    assert Cin_w == Cin and K == K2, "groups=1, square kernels only"
    s, p = int(stride), int(padding)
    out_dt = x.dtype if out_dtype is None else out_dtype

    Ho = (H + 2 * p - K) // s + 1
    Wo = (W + 2 * p - K) // s + 1
    HWo = Ho * Wo
    KKC = Cin * K * K

    # ---- im2col straight from NCHW (no transposes), contraction = (ci,kh,kw) ----
    if K == 1 and s == 1 and p == 0:
        patches = x.reshape(N, Cin, HWo)                     # free reshape
    else:
        x_sp = jnp.pad(x, ((0, 0), (0, 0), (p, p), (p, p)))  # zero spatial pad
        taps = []
        for kh in range(K):
            for kw in range(K):
                taps.append(x_sp[:, :, kh:kh + s * (Ho - 1) + 1:s,
                                 kw:kw + s * (Wo - 1) + 1:s])   # (N,Cin,Ho,Wo)
        patches = jnp.stack(taps, axis=2).reshape(N, KKC, HWo)

    w2d = weight.reshape(Cout, KKC)                          # free reshape

    # ---- tile sizes: lane-dense output, 128/16-aligned, biggest that fits ----
    HWo_p, THW = _pad_and_tile(HWo, 128, thw_cap)   # lane dim: mult of 128
    Cout_p, TCo = _pad_and_tile(Cout, 16, tco_cap)  # bf16 sublane: mult of 16
    KKC_p, TKK = _pad_and_tile(KKC, 128, tkk_cap)   # contraction: mult of 128
    num_k = KKC_p // TKK

    patches = jnp.pad(patches.astype(compute_dtype),
                      ((0, 0), (0, KKC_p - KKC), (0, HWo_p - HWo)))
    w2d = jnp.pad(w2d.astype(compute_dtype),
                  ((0, Cout_p - Cout), (0, KKC_p - KKC)))
    b2d = jnp.pad(bias, (0, Cout_p - Cout)).reshape(Cout_p, 1).astype(jnp.float32)

    # ---- VMEM budget (double-buffered tiles + optional accumulator) ----
    cbpe = jnp.dtype(compute_dtype).itemsize
    obpe = jnp.dtype(out_dt).itemsize
    footprint = 2 * (TCo * TKK * cbpe + TKK * THW * cbpe
                     + TCo * THW * obpe + TCo * 4)
    if num_k > 1:
        footprint += TCo * THW * 4
    vmem_limit = int(min(max(footprint + (4 << 20), 32 << 20), 64 << 20))

    cost = pl.CostEstimate(
        flops=2 * N * Cout_p * HWo_p * KKC_p,
        transcendentals=0,
        bytes_accessed=int(w2d.size * cbpe * max(1, HWo_p // THW)
                           + patches.size * cbpe
                           + N * Cout_p * HWo_p * obpe
                           + Cout_p * 4),
    )

    out_shape = jax.ShapeDtypeStruct((N, Cout_p, HWo_p), out_dt)

    if num_k == 1:
        # Common path (all ResNet-50 layers): no reduction axis, no accumulator.
        # co innermost so the big patch block (n,0,hw) is reused across co steps.
        grid = (N, HWo_p // THW, Cout_p // TCo)
        kernel = functools.partial(_conv_gemm_kernel, apply_relu=bool(relu))
        out = pl.pallas_call(
            kernel,
            out_shape=out_shape,
            grid_spec=pltpu.PrefetchScalarGridSpec(
                num_scalar_prefetch=0,
                grid=grid,
                in_specs=[
                    pl.BlockSpec((TCo, TKK), lambda n, hw, co: (co, 0)),
                    pl.BlockSpec((1, TKK, THW), lambda n, hw, co: (n, 0, hw)),
                    pl.BlockSpec((TCo, 1), lambda n, hw, co: (co, 0)),
                ],
                out_specs=pl.BlockSpec((1, TCo, THW),
                                       lambda n, hw, co: (n, co, hw)),
            ),
            compiler_params=pltpu.CompilerParams(
                dimension_semantics=("parallel", "parallel", "arbitrary"),
                vmem_limit_bytes=vmem_limit,
            ),
            cost_estimate=cost,
        )(w2d, patches, b2d)
    else:
        # Fallback for KKC larger than tkk_cap: classic reduction-last grid.
        grid = (N, HWo_p // THW, Cout_p // TCo, num_k)
        kernel = functools.partial(_conv_gemm_kernel_kred, apply_relu=bool(relu))
        out = pl.pallas_call(
            kernel,
            out_shape=out_shape,
            grid_spec=pltpu.PrefetchScalarGridSpec(
                num_scalar_prefetch=0,
                grid=grid,
                in_specs=[
                    pl.BlockSpec((TCo, TKK), lambda n, hw, co, k: (co, k)),
                    pl.BlockSpec((1, TKK, THW), lambda n, hw, co, k: (n, k, hw)),
                    pl.BlockSpec((TCo, 1), lambda n, hw, co, k: (co, 0)),
                ],
                out_specs=pl.BlockSpec((1, TCo, THW),
                                       lambda n, hw, co, k: (n, co, hw)),
                scratch_shapes=[pltpu.VMEM((TCo, THW), jnp.float32)],
            ),
            compiler_params=pltpu.CompilerParams(
                dimension_semantics=("parallel", "parallel", "parallel",
                                     "arbitrary"),
                vmem_limit_bytes=vmem_limit,
            ),
            cost_estimate=cost,
        )(w2d, patches, b2d)

    # (N, Cout, Ho*Wo) -> NCHW is a free reshape (no transpose needed).
    return out[:, :Cout, :HWo].reshape(N, Cout, Ho, Wo)


def conv2d_ref(x, weight, bias, *, stride, padding, relu):
    """XLA reference with the same bf16-input / f32-accumulate numerics."""
    xr = x.astype(jnp.bfloat16).astype(jnp.float32)
    wr = weight.astype(jnp.bfloat16).astype(jnp.float32)
    out = jax.lax.conv_general_dilated(
        xr, wr, window_strides=(stride, stride),
        padding=[(padding, padding), (padding, padding)],
        dimension_numbers=("NCHW", "OIHW", "NCHW"),
        precision=jax.lax.Precision.HIGHEST)
    out = out + bias.reshape(1, -1, 1, 1)
    if relu:
        out = jnp.maximum(out, 0.0)
    return out


if __name__ == "__main__":
    key = jax.random.PRNGKey(0)
    k1, k2, k3, k4, k5, k6, k7 = jax.random.split(key, 7)

    # Res_50 takes a 1-channel image; small spatial size for the demo.
    N, H, W = 2, 16, 16
    x = jax.random.normal(k1, (N, 1, H, W), dtype=jnp.float32)

    # --- the module's own layer: nn.Conv2d(1, 3, kernel_size=1), no activation ---
    w0 = 0.5 * jax.random.normal(k2, (3, 1, 1, 1), dtype=jnp.float32)
    b0 = 0.1 * jax.random.normal(k3, (3,), dtype=jnp.float32)
    y0 = conv2d_pallas(x, w0, b0, stride=1, padding=0, relu=False)

    # --- representative (downsized) ResNet-50 conv: 3x3, stride 2, pad 1, + ReLU ---
    w1 = 0.1 * jax.random.normal(k4, (8, 3, 3, 3), dtype=jnp.float32)
    b1 = 0.1 * jax.random.normal(k5, (8,), dtype=jnp.float32)
    y1 = conv2d_pallas(y0, w1, b1, stride=2, padding=1, relu=True)

    # --- representative 1x1 "pointwise" bottleneck conv (free-reshape im2col) ---
    w2 = 0.1 * jax.random.normal(k6, (16, 8, 1, 1), dtype=jnp.float32)
    b2 = 0.1 * jax.random.normal(k7, (16,), dtype=jnp.float32)
    y2 = conv2d_pallas(y1, w2, b2, stride=1, padding=0, relu=True)

    y0, y1, y2 = jax.block_until_ready((y0, y1, y2))

    r0 = conv2d_ref(x, w0, b0, stride=1, padding=0, relu=False)
    r1 = conv2d_ref(y0, w1, b1, stride=2, padding=1, relu=True)
    r2 = conv2d_ref(y1, w2, b2, stride=1, padding=0, relu=True)

    assert y0.shape == (N, 3, 16, 16)
    assert y1.shape == (N, 8, 8, 8)
    assert y2.shape == (N, 16, 8, 8)
    assert jnp.allclose(y0, r0, rtol=1e-3, atol=1e-3)
    assert jnp.allclose(y1, r1, rtol=1e-3, atol=1e-3)
    assert jnp.allclose(y2, r2, rtol=1e-3, atol=1e-3)

    print("KERNEL_OK")
</pallas_src>

<mosaic_0001>
module attributes {stable_mosaic.version = 11 : i64} {
  func.func @_conv_gemm_kernel(%arg0: i32, %arg1: i32, %arg2: i32, %arg3: memref<16x128xbf16, #tpu.memory_space<vmem>>, %arg4: memref<1x128x256xbf16, #tpu.memory_space<vmem>>, %arg5: memref<16x1xf32, #tpu.memory_space<vmem>>, %arg6: memref<1x16x256xf32, #tpu.memory_space<vmem>>) attributes {dimension_semantics = [#tpu.dimension_semantics<parallel>, #tpu.dimension_semantics<parallel>, #tpu.dimension_semantics<arbitrary>], iteration_bounds = array<i64: 2, 1, 1>, scalar_prefetch = 0 : i64, scratch_operands = 0 : i64, tpu.core_type = #tpu.core_type<tc>, window_params = [{transform_indices = @transform_0, window_bounds = array<i64: 16, 128>}, {transform_indices = @transform_1, window_bounds = array<i64: 1, 128, 256>}, {transform_indices = @transform_2, window_bounds = array<i64: 16, 1>}, {transform_indices = @transform_3, window_bounds = array<i64: 1, 16, 256>}]} {
    %c0 = arith.constant 0 : index
    %c0_0 = arith.constant 0 : index
    %0 = vector.load %arg3[%c0, %c0_0] : memref<16x128xbf16, #tpu.memory_space<vmem>>, vector<16x128xbf16>
    %c0_1 = arith.constant 0 : index
    %c0_2 = arith.constant 0 : index
    %c0_3 = arith.constant 0 : index
    %1 = vector.load %arg4[%c0_1, %c0_2, %c0_3] : memref<1x128x256xbf16, #tpu.memory_space<vmem>>, vector<1x128x256xbf16>
    %2 = vector.shape_cast %1 : vector<1x128x256xbf16> to vector<128x256xbf16>
    %cst = arith.constant dense<0.000000e+00> : vector<16x256xf32>
    %3 = tpu.matmul %0, %2, %cst {dimension_numbers = #tpu.dot_dimension_numbers<[1], [0], [0], [1], [0, 0, 1, 1], [], []>} : vector<16x128xbf16>, vector<128x256xbf16>, vector<16x256xf32> -> vector<16x256xf32>
    %c0_4 = arith.constant 0 : index
    %c0_5 = arith.constant 0 : index
    %4 = vector.load %arg5[%c0_4, %c0_5] : memref<16x1xf32, #tpu.memory_space<vmem>>, vector<16x1xf32>
    %5 = vector.broadcast %4 : vector<16x1xf32> to vector<16x256xf32>
    %6 = arith.addf %3, %5 : vector<16x256xf32>
    %c0_6 = arith.constant 0 : index
    %c0_7 = arith.constant 0 : index
    %c0_8 = arith.constant 0 : index
    %7 = vector.load %arg6[%c0_6, %c0_7, %c0_8] : memref<1x16x256xf32, #tpu.memory_space<vmem>>, vector<1x16x256xf32>
    %8 = vector.shape_cast %7 : vector<1x16x256xf32> to vector<16x256xf32>
    %9 = vector.shape_cast %6 : vector<16x256xf32> to vector<1x16x256xf32>
    tpu.vector_store %arg6[%c0_6, %c0_7, %c0_8], %9 {strides = array<i32>} : memref<1x16x256xf32, #tpu.memory_space<vmem>>, vector<1x16x256xf32>,
    return
  }
  func.func @transform_0(%arg0: i32, %arg1: i32, %arg2: i32) -> (i32, i32) {
    %c0_i32 = arith.constant 0 : i32
    %c0_i32_0 = arith.constant 0 : i32
    return %arg2, %c0_i32 : i32, i32
  }
  func.func @transform_1(%arg0: i32, %arg1: i32, %arg2: i32) -> (i32, i32, i32) {
    %c0_i32 = arith.constant 0 : i32
    %c0_i32_0 = arith.constant 0 : i32
    return %arg0, %c0_i32, %arg1 : i32, i32, i32
  }
  func.func @transform_2(%arg0: i32, %arg1: i32, %arg2: i32) -> (i32, i32) {
    %c0_i32 = arith.constant 0 : i32
    %c0_i32_0 = arith.constant 0 : i32
    return %arg2, %c0_i32 : i32, i32
  }
  func.func @transform_3(%arg0: i32, %arg1: i32, %arg2: i32) -> (i32, i32, i32) {
    %c0_i32 = arith.constant 0 : i32
    return %arg0, %arg2, %arg1 : i32, i32, i32
  }
}

</mosaic_0001>

<llo_original>
// kernel: tpu_custom_call.1
$region0: #{tpu_custom_call.1}
  #allocation0 [shape = 'u32[]', space=smem, size = 0x4, offset = 0x4, fixed_abs, tag = 'smem constant byte address 0x4 - core index']
  #allocation1 [shape = 'u32[144,128]{1,0:T(1,128)}', space=vmem, size = 0x12000, scoped, tag = 'internal scratch']
  %s0 = inlined_call_operand.vmem [shape: bf16[16,128], index: 0, kind: input, shape index: {}]
  %s1 = inlined_call_operand.hbm [shape: bf16[2,128,256], index: 1, kind: input, shape index: {}]
  %s2 = inlined_call_operand.vmem [shape: f32[16,1], index: 2, kind: input, shape index: {}]
  %s3 = inlined_call_operand.hbm [shape: f32[2,16,256], index: 3, kind: output, shape index: {}]
  %s4 = sld [smem:[#allocation0]]
  $region49: #{tpu_custom_call.1} parent=0
    _
  %s6 = ssub.s32 1, %s4
  %s7 = scalar_select 0, %s6, %s4
  $region1: #{tpu_custom_call.1} parent=0
    #allocation2 [shape = 'u8[131072]{0}', space=vmem, size = 0x20000, scoped, tag = 'input window, operand 1']
    #allocation3 [shape = 's32[2]{0}', space=sflag, size = 0x8, scoped, tag = 'scoped memory for tpu_custom_call.1']
    #allocation4 [shape = 's32[2]{0}', space=sflag, size = 0x8, scoped, tag = 'scoped memory for tpu_custom_call.1']
    #allocation5 [shape = 'u8[32768]{0}', space=vmem, size = 0x8000, scoped, tag = 'output window, operand 0']
    %8 = vsyncpa [#allocation3], 0
    %s9 = scalar_lea.sflag [#allocation3], 1
    %10 = vsyncpa %s9, 0
    %11 = vsyncpa [#allocation4], 0
    %s12 = scalar_lea.sflag [#allocation4], 1
    %13 = vsyncpa %s12, 0
    loop: start=0, step=1, limit=4
    $region2: #{tpu_custom_call.1} parent=1 // loop_pre_header
      _
    $region3: #{tpu_custom_call.1} parent=1 // loop_header
      %s15 = sphi 0, %s19
      %p16 = scmp.ge.s32.totalorder %s15, 4
      %s22 = sphi 0, %s41
      %s23 = sphi 0, %s37
      %s24 = sphi 0, %s33
      %s25 = sphi 0, %s22
      %s26 = sphi 0, %s23
      %s27 = sphi 0, %s24
      %s28 = sphi 0, %s25
      %s29 = sphi 0, %s26
      %s30 = sphi 0, %s27
      %s44 = sphi 0, %s46
      %s47 = sphi 0, %s44
      %s48 = sphi 0, %s47
      %s64 = sphi 0, %s48
      %s72 = sphi 0, %s74
      %s75 = sphi 0, %s72
      %s76 = sphi 0, %s75
      %s92 = sphi 0, %s76
      %s98 = sphi 0, %s100
      %s101 = sphi 0, %s98
      %s102 = sphi 0, %s101
      %s118 = sphi 0, %s102
      %s128 = sphi 0, %s130
      %s131 = sphi 0, %s128
      %s132 = sphi 0, %s131
      %s148 = sphi 0, %s132
    $region4: #{tpu_custom_call.1} parent=1 // loop_header_branch
      %18 = sbr.rel (%p16) target = $region8
    $region5: #{tpu_custom_call.1} parent=1 // loop_body
      %s20 = ssub.s32 %s15, 1
      %s21 = ssub.s32 %s15, 2
      %s31 = sadd.s32 1, %s24
      %p32 = scmp.ge.s32.totalorder %s31, 1
      %s33 = scalar_select %p32, 0, %s31
      %s34 = sadd.s32 1, %s23
      %s35 = scalar_select %p32, %s34, %s23
      %p36 = scmp.ge.s32.totalorder %s35, 1
      %s37 = scalar_select %p36, 0, %s35
      %s38 = sadd.s32 1, %s22
      %s39 = scalar_select %p36, %s38, %s22
      %p40 = scmp.ge.s32.totalorder %s39, 2
      %s41 = scalar_select %p40, 0, %s39
      %s42 = ssub.s32 %s24, %s33
      %p43 = scmp.eq.s32.totalorder %s42, 0
      %s45 = sadd.s32 %s44, 1
      %s46 = scalar_select %p43, %s44, %s45
      %p49 = pneg %p43
      %p50 = scmp.eq.s32.totalorder %s15, 1
      %p51 = por %p49, %p50
      %p52 = scmp.ne.s32.totalorder %s44, %s47
      %p53 = scmp.eq.s32.totalorder %s15, 0
      %p54 = por %p52, %p53
      %p55 = scmp.ne.s32.totalorder %s44, %s47
      %p56 = scmp.eq.s32.totalorder %s20, 1
      %p57 = por %p55, %p56
      %p58 = scmp.ne.s32.totalorder %s47, %s48
      %p59 = scmp.eq.s32.totalorder %s20, 0
      %p60 = por %p58, %p59
      %p61 = scmp.ne.s32.totalorder %s47, %s48
      %p62 = scmp.eq.s32.totalorder %s21, 1
      %p63 = por %p61, %p62
      %p65 = scmp.ne.s32.totalorder %s48, %s64
      %p66 = scmp.eq.s32.totalorder %s21, 0
      %p67 = por %p65, %p66
      %s68 = ssub.s32 %s22, %s41
      %s69 = ssub.s32 %s23, %s37
      %s70 = sor.u32 %s68, %s69
      %p71 = scmp.eq.s32.totalorder %s70, 0
      %s73 = sadd.s32 %s72, 1
      %s74 = scalar_select %p71, %s72, %s73
      %p77 = pneg %p71
      %p78 = scmp.eq.s32.totalorder %s15, 1
      %p79 = por %p77, %p78
      %p80 = scmp.ne.s32.totalorder %s72, %s75
      %p81 = scmp.eq.s32.totalorder %s15, 0
      %p82 = por %p80, %p81
      %p83 = scmp.ne.s32.totalorder %s72, %s75
      %p84 = scmp.eq.s32.totalorder %s20, 1
      %p85 = por %p83, %p84
      %p86 = scmp.ne.s32.totalorder %s75, %s76
      %p87 = scmp.eq.s32.totalorder %s20, 0
      %p88 = por %p86, %p87
      %p89 = scmp.ne.s32.totalorder %s75, %s76
      %p90 = scmp.eq.s32.totalorder %s21, 1
      %p91 = por %p89, %p90
      %p93 = scmp.ne.s32.totalorder %s76, %s92
      %p94 = scmp.eq.s32.totalorder %s21, 0
      %p95 = por %p93, %p94
      %s96 = ssub.s32 %s24, %s33
      %p97 = scmp.eq.s32.totalorder %s96, 0
      %s99 = sadd.s32 %s98, 1
      %s100 = scalar_select %p97, %s98, %s99
      %p103 = pneg %p97
      %p104 = scmp.eq.s32.totalorder %s15, 1
      %p105 = por %p103, %p104
      %p106 = scmp.ne.s32.totalorder %s98, %s101
      %p107 = scmp.eq.s32.totalorder %s15, 0
      %p108 = por %p106, %p107
      %p109 = scmp.ne.s32.totalorder %s98, %s101
      %p110 = scmp.eq.s32.totalorder %s20, 1
      %p111 = por %p109, %p110
      %p112 = scmp.ne.s32.totalorder %s101, %s102
      %p113 = scmp.eq.s32.totalorder %s20, 0
      %p114 = por %p112, %p113
      %p115 = scmp.ne.s32.totalorder %s101, %s102
      %p116 = scmp.eq.s32.totalorder %s21, 1
      %p117 = por %p115, %p116
      %p119 = scmp.ne.s32.totalorder %s102, %s118
      %p120 = scmp.eq.s32.totalorder %s21, 0
      %p121 = por %p119, %p120
      %s122 = ssub.s32 %s22, %s41
      %s123 = ssub.s32 %s24, %s33
      %s124 = sor.u32 %s122, %s123
      %s125 = ssub.s32 %s23, %s37
      %s126 = sor.u32 %s124, %s125
      %p127 = scmp.eq.s32.totalorder %s126, 0
      %s129 = sadd.s32 %s128, 1
      %s130 = scalar_select %p127, %s128, %s129
      %p133 = pneg %p127
      %p134 = scmp.eq.s32.totalorder %s15, 1
      %p135 = por %p133, %p134
      %p136 = scmp.ne.s32.totalorder %s128, %s131
      %p137 = scmp.eq.s32.totalorder %s15, 0
      %p138 = por %p136, %p137
      %p139 = scmp.ne.s32.totalorder %s128, %s131
      %p140 = scmp.eq.s32.totalorder %s20, 1
      %p141 = por %p139, %p140
      %p142 = scmp.ne.s32.totalorder %s131, %s132
      %p143 = scmp.eq.s32.totalorder %s20, 0
      %p144 = por %p142, %p143
      %p145 = scmp.ne.s32.totalorder %s131, %s132
      %p146 = scmp.eq.s32.totalorder %s21, 1
      %p147 = por %p145, %p146
      %p149 = scmp.ne.s32.totalorder %s132, %s148
      %p150 = scmp.eq.s32.totalorder %s21, 0
      %p151 = por %p149, %p150
      %p152 = scmp.le.s32.totalorder 1, %s15
      %p153 = scmp.lt.s32.totalorder %s15, 3
      %p154 = pnand %p152, %p153
      %p155 = pneg %p154
      // Predicated region
      $region9: #{tpu_custom_call.1} parent=5 // pred_check
        _
      $region10: #{tpu_custom_call.1} parent=5 // pred_check_branch
        %157 = sbr.rel (%p154) target = $region12
      $region11: #{tpu_custom_call.1} parent=5 // pred_region
        %s158 = ssub.s32 %s15, 1
        // Predicated region
        $region13: #{tpu_custom_call.1} parent=11 // pred_check
          %p159 = pneg %p60
        $region14: #{tpu_custom_call.1} parent=11 // pred_check_branch
          %161 = sbr.rel (%p159) target = $region16
        $region15: #{tpu_custom_call.1} parent=11 // pred_region
          %s162 = smul.u32 2, %s27
          %p163 = scmp.lt.s32.totalorder %s162, 1
          %s164 = scalar_select %p163, %s162, 1
          %s165 = smul.addr %s164, 4
          %s166 = scalar_lea.vmem %s0, %s165
          %s167 = smul.u32 2, %s27
        $region16: #{tpu_custom_call.1} parent=11 // pred_fallthru
          _
        // Predicated region
        $region17: #{tpu_custom_call.1} parent=11 // pred_check
          %p168 = pneg %p114
        $region18: #{tpu_custom_call.1} parent=11 // pred_check_branch
          %170 = sbr.rel (%p168) target = $region20
        $region19: #{tpu_custom_call.1} parent=11 // pred_region
          %s171 = smul.u32 2, %s27
          %p172 = scmp.lt.s32.totalorder %s171, 1
          %s173 = scalar_select %p172, %s171, 1
          %s174 = smul.addr %s173, 8
          %s175 = scalar_lea.vmem %s2, %s174
          %s176 = smul.u32 2, %s27
        $region20: #{tpu_custom_call.1} parent=11 // pred_fallthru
          _
      $region12: #{tpu_custom_call.1} parent=5 // pred_fallthru
        _
      %p177 = scmp.lt.s32.totalorder %s15, 2
      // Predicated region
      $region21: #{tpu_custom_call.1} parent=5 // pred_check
        %p178 = pneg %p177
      $region22: #{tpu_custom_call.1} parent=5 // pred_check_branch
        %180 = sbr.rel (%p178) target = $region24
      $region23: #{tpu_custom_call.1} parent=5 // pred_region
        // Predicated region
        $region25: #{tpu_custom_call.1} parent=23 // pred_check
          %p181 = pneg %p82
        $region26: #{tpu_custom_call.1} parent=23 // pred_check_branch
          %183 = sbr.rel (%p181) target = $region28
        $region27: #{tpu_custom_call.1} parent=23 // pred_region
          %s184 = sand.u32 %s72, 1
          %s185 = scalar_lea.sflag [#allocation3], %s184
          %s186 = sand.u32 %s72, 1
          %s187 = smul.addr %s186, 128
          %s188 = scalar_lea.vmem [#allocation2], %s187
          %s189 = smul.u32 2, %s23
          %s191 = ssub.s32 2048, 2048
          %192 = vsyncadd %s185, %s191
          %s193 = smul.addr %s22, 32
          %s194 = sadd.s32 %s189, %s193
          %s195 = smul.addr %s194, 64
          %s196 = scalar_lea.hbm %s1, %s195
          %s197 = sshll.u32 %s188, 4
          %s198 = int_to_ptr.vmem [resolvable:$true] %s197
          %203 = dma.hbm_to_vmem [thread:$0]  %s196, 2048, %s198, %s185, 128, 128, 8
        $region28: #{tpu_custom_call.1} parent=23 // pred_fallthru
          _
      $region24: #{tpu_custom_call.1} parent=5 // pred_fallthru
        _
      %p204 = scmp.le.s32.totalorder 1, %s15
      %p205 = scmp.lt.s32.totalorder %s15, 3
      %p206 = pnand %p204, %p205
      %p207 = pneg %p206
      // Predicated region
      $region29: #{tpu_custom_call.1} parent=5 // pred_check
        _
      $region30: #{tpu_custom_call.1} parent=5 // pred_check_branch
        %209 = sbr.rel (%p206) target = $region32
      $region31: #{tpu_custom_call.1} parent=5 // pred_region
        %s210 = ssub.s32 %s15, 1
        %s211 = sand.u32 %s75, 1
        %s212 = scalar_lea.sflag [#allocation3], %s211
        %s213 = sand.u32 %s75, 1
        %s214 = smul.addr %s213, 128
        %s215 = scalar_lea.vmem [#allocation2], %s214
        // Predicated region
        $region33: #{tpu_custom_call.1} parent=31 // pred_check
          %p216 = pneg %p88
        $region34: #{tpu_custom_call.1} parent=31 // pred_check_branch
          %218 = sbr.rel (%p216) target = $region36
        $region35: #{tpu_custom_call.1} parent=31 // pred_region
          %219 = dma.done %s212, 2048
        $region36: #{tpu_custom_call.1} parent=31 // pred_fallthru
          _
        %s220 = smul.u32 2, %s27
        %p221 = scmp.lt.s32.totalorder %s220, 1
        %s222 = scalar_select %p221, %s220, 1
        %s223 = smul.addr %s222, 4
        %s224 = scalar_lea.vmem %s0, %s223
        %p225 = pneg %p60
        %p226 = pneg %p57
        %s227 = sand.u32 %s75, 1
        %s228 = scalar_lea.sflag [#allocation3], %s227
        %s229 = sand.u32 %s75, 1
        %s230 = smul.addr %s229, 128
        %s231 = scalar_lea.vmem [#allocation2], %s230
        %p232 = pneg %p88
        %p233 = pneg %p85
        %s234 = smul.u32 2, %s27
        %p235 = scmp.lt.s32.totalorder %s234, 1
        %s236 = scalar_select %p235, %s234, 1
        %s237 = smul.addr %s236, 8
        %s238 = scalar_lea.vmem %s2, %s237
        %p239 = pneg %p114
        %p240 = pneg %p111
        %p241 = pneg %p144
        %p242 = pneg %p141
        %s243 = sand.u32 %s131, 1
        %s244 = scalar_lea.sflag [#allocation4], %s243
        %s245 = sand.u32 %s131, 1
        %s246 = smul.addr %s245, 32
        %s247 = scalar_lea.vmem [#allocation5], %s246
        %s248 = smul.u32 2, %s27
        %p249 = scmp.lt.s32.totalorder %s248, 1
        %s250 = scalar_select %p249, %s248, 1
        %s251 = smul.addr %s250, 4
        %s252 = scalar_lea.vmem %s0, %s251
        %s253 = smul.u32 2, %s27
        %s254 = smul.u32 2, %s26
        %s255 = smul.u32 2, %s27
        %p256 = scmp.lt.s32.totalorder %s255, 1
        %s257 = scalar_select %p256, %s255, 1
        %s258 = smul.addr %s257, 8
        %s259 = scalar_lea.vmem %s2, %s258
        %s260 = smul.u32 2, %s27
        %s261 = smul.u32 2, %s27
        %s262 = smul.u32 2, %s26
        %v264 = vld [vmem:[%s252] sm:$0xf]
        %v265 = vld [vmem:[%s252 + $0x4] sm:$0xf]
        %v266 = vld [vmem:[%s215] sm:$0xff]
        %v267 = vld [vmem:[%s215 + $0x8] sm:$0xff]
        %v268 = vld [vmem:[%s215 + $0x10] sm:$0xff]
        %v269 = vld [vmem:[%s215 + $0x18] sm:$0xff]
        %v270 = vld [vmem:[%s215 + $0x20] sm:$0xff]
        %v271 = vld [vmem:[%s215 + $0x28] sm:$0xff]
        %v272 = vld [vmem:[%s215 + $0x30] sm:$0xff]
        %v273 = vld [vmem:[%s215 + $0x38] sm:$0xff]
        %v274 = vld [vmem:[%s215 + $0x40] sm:$0xff]
        %v275 = vld [vmem:[%s215 + $0x48] sm:$0xff]
        %v276 = vld [vmem:[%s215 + $0x50] sm:$0xff]
        %v277 = vld [vmem:[%s215 + $0x58] sm:$0xff]
        %v278 = vld [vmem:[%s215 + $0x60] sm:$0xff]
        %v279 = vld [vmem:[%s215 + $0x68] sm:$0xff]
        %v280 = vld [vmem:[%s215 + $0x70] sm:$0xff]
        %v281 = vld [vmem:[%s215 + $0x78] sm:$0xff]
        %v282 = vld [vmem:[%s259] sm:$0xff]
        %v283 = vld [vmem:[%s259 + $0x8] sm:$0xff]
        %285 = vset.pattern.permute.xlu0 0
        %286 = vperm.xlu0 %285, %v282
        %v287 = vpop.permute.xlu0 %286
        %290 = vset.pattern.permute.xlu0 0
        %291 = vperm.xlu0 %290, %v283
        %v292 = vpop.permute.xlu0 %291
        %v296 = vunpack.c.l.b16 %v264
        %v297 = vunpack.c.l.b16 %v265
        %v298 = vpack.c.b16 %v297, %v296
        %v316 = vunpack.c.l.b16 %v266
        %v317 = vunpack.c.h.b16 %v266
        %v318 = vunpack.c.l.b16 %v267
        %v319 = vunpack.c.h.b16 %v267
        %v320 = vunpack.c.l.b16 %v268
        %v321 = vunpack.c.h.b16 %v268
        %v322 = vunpack.c.l.b16 %v269
        %v323 = vunpack.c.h.b16 %v269
        %v324 = vunpack.c.l.b16 %v270
        %v325 = vunpack.c.h.b16 %v270
        %v326 = vunpack.c.l.b16 %v271
        %v327 = vunpack.c.h.b16 %v271
        %v328 = vunpack.c.l.b16 %v272
        %v329 = vunpack.c.h.b16 %v272
        %v330 = vunpack.c.l.b16 %v273
        %v331 = vunpack.c.h.b16 %v273
        %v332 = vunpack.c.l.b16 %v274
        %v333 = vunpack.c.h.b16 %v274
        %v334 = vunpack.c.l.b16 %v275
        %v335 = vunpack.c.h.b16 %v275
        %v336 = vunpack.c.l.b16 %v276
        %v337 = vunpack.c.h.b16 %v276
        %v338 = vunpack.c.l.b16 %v277
        %v339 = vunpack.c.h.b16 %v277
        %v340 = vunpack.c.l.b16 %v278
        %v341 = vunpack.c.h.b16 %v278
        %v342 = vunpack.c.l.b16 %v279
        %v343 = vunpack.c.h.b16 %v279
        %v344 = vunpack.c.l.b16 %v280
        %v345 = vunpack.c.h.b16 %v280
        %v346 = vunpack.c.l.b16 %v281
        %v347 = vunpack.c.h.b16 %v281
        %v348 = vpack.c.b16 %v318, %v316
        %v349 = vpack.c.b16 %v319, %v317
        %v350 = vpack.c.b16 %v322, %v320
        %v351 = vpack.c.b16 %v323, %v321
        %v352 = vpack.c.b16 %v326, %v324
        %v353 = vpack.c.b16 %v327, %v325
        %v354 = vpack.c.b16 %v330, %v328
        %v355 = vpack.c.b16 %v331, %v329
        %v356 = vpack.c.b16 %v334, %v332
        %v357 = vpack.c.b16 %v335, %v333
        %v358 = vpack.c.b16 %v338, %v336
        %v359 = vpack.c.b16 %v339, %v337
        %v360 = vpack.c.b16 %v342, %v340
        %v361 = vpack.c.b16 %v343, %v341
        %v362 = vpack.c.b16 %v346, %v344
        %v363 = vpack.c.b16 %v347, %v345
        %380 = vmatprep.subr.bf16.mxu0 %v349
        %381 = vmatpush1.bf16.msra.mxu0 %v348
        %382 = vmatprep.subr.bf16.mxu0 %v351
        %383 = vmatpush1.bf16.msra.mxu0 %v350
        %384 = vmatprep.subr.bf16.mxu0 %v353
        %385 = vmatpush1.bf16.msra.mxu0 %v352
        %386 = vmatprep.subr.bf16.mxu0 %v355
        %387 = vmatpush1.bf16.msra.mxu0 %v354
        %388 = vmatprep.subr.bf16.mxu0 %v357
        %389 = vmatpush1.bf16.msra.mxu0 %v356
        %390 = vmatprep.subr.bf16.mxu0 %v359
        %391 = vmatpush1.bf16.msra.mxu0 %v358
        %392 = vmatprep.subr.bf16.mxu0 %v361
        %393 = vmatpush1.bf16.msra.mxu0 %v360
        %394 = vmatprep.subr.bf16.mxu0 %v363
        %395 = vmatpush1.bf16.msra.mxu0 %v362
        %396 = vmatprep.subr.bf16.mxu0 0
        %397 = vmatpush1.bf16.msra.mxu0 0
        %398 = vmatprep.subr.bf16.mxu0 0
        %399 = vmatpush1.bf16.msra.mxu0 0
        %400 = vmatprep.subr.bf16.mxu0 0
        %401 = vmatpush1.bf16.msra.mxu0 0
        %402 = vmatprep.subr.bf16.mxu0 0
        %403 = vmatpush1.bf16.msra.mxu0 0
        %404 = vmatprep.subr.bf16.mxu0 0
        %405 = vmatpush1.bf16.msra.mxu0 0
        %406 = vmatprep.subr.bf16.mxu0 0
        %407 = vmatpush1.bf16.msra.mxu0 0
        %408 = vmatprep.subr.bf16.mxu0 0
        %409 = vmatpush1.bf16.msra.mxu0 0
        %410 = vmatprep.subr.bf16.mxu0 0
        %411 = vmatpush1.bf16.msra.mxu0 0
        %412 = vmatprep.mubr.bf16.mxu0 0
        %413 = vmatmul.mubr.bf16.gmra.mrb[0].mxu0 %v298
        %v414 = vpop.f32.mrb[0].mxu0
        %v415 = vadd.f32 %v287, %v414
        %v416 = vpop.f32.mrb[0].mxu0
        %v417 = vadd.f32 %v287, %v416
        %v418 = vpop.f32.mrb[0].mxu0
        %v419 = vadd.f32 %v292, %v418
        %v420 = vpop.f32.mrb[0].mxu0
        %v421 = vadd.f32 %v292, %v420
        %422 = vdwg.mxu0
        %423 = vst [vmem:[%s247] sm:$0xff] %v415
        %424 = vst [vmem:[%s247 + $0x8] sm:$0xff] %v417
        %425 = vst [vmem:[%s247 + $0x10] sm:$0xff] %v419
        %426 = vst [vmem:[%s247 + $0x18] sm:$0xff] %v421
        %s427 = sand.u32 %s131, 1
        %s428 = scalar_lea.sflag [#allocation4], %s427
        %s429 = sand.u32 %s131, 1
        %s430 = smul.addr %s429, 32
        %s431 = scalar_lea.vmem [#allocation5], %s430
        // Predicated region
        $region37: #{tpu_custom_call.1} parent=31 // pred_check
          %p432 = pneg %p141
        $region38: #{tpu_custom_call.1} parent=31 // pred_check_branch
          %434 = sbr.rel (%p432) target = $region40
        $region39: #{tpu_custom_call.1} parent=31 // pred_region
          %s435 = smul.u32 2, %s27
          %s436 = smul.u32 2, %s26
          %s438 = ssub.s32 512, 512
          %439 = vsyncadd %s428, %s438
          %s440 = smul.addr %s435, 2
          %s441 = sadd.s32 %s436, %s440
          %s442 = smul.addr %s25, 4
          %s443 = sadd.s32 %s441, %s442
          %s444 = smul.addr %s443, 128
          %s445 = scalar_lea.hbm %s3, %s444
          %s446 = sshll.u32 %s431, 4
          %s447 = int_to_ptr.vmem [resolvable:$true] %s446
          %452 = dma.vmem_to_hbm [thread:$0]  %s447, 512, %s445, %s428, 256, 256, 16
        $region40: #{tpu_custom_call.1} parent=31 // pred_fallthru
          _
      $region32: #{tpu_custom_call.1} parent=5 // pred_fallthru
        _
      %p453 = scmp.le.s32.totalorder 2, %s15
      // Predicated region
      $region41: #{tpu_custom_call.1} parent=5 // pred_check
        %p454 = pneg %p453
      $region42: #{tpu_custom_call.1} parent=5 // pred_check_branch
        %456 = sbr.rel (%p454) target = $region44
      $region43: #{tpu_custom_call.1} parent=5 // pred_region
        %s457 = ssub.s32 %s15, 2
        // Predicated region
        $region45: #{tpu_custom_call.1} parent=43 // pred_check
          %p458 = pneg %p147
        $region46: #{tpu_custom_call.1} parent=43 // pred_check_branch
          %460 = sbr.rel (%p458) target = $region48
        $region47: #{tpu_custom_call.1} parent=43 // pred_region
          %s461 = sand.u32 %s132, 1
          %s462 = scalar_lea.sflag [#allocation4], %s461
          %s463 = sand.u32 %s132, 1
          %s464 = smul.addr %s463, 32
          %s465 = scalar_lea.vmem [#allocation5], %s464
          %466 = dma.done %s462, 512
        $region48: #{tpu_custom_call.1} parent=43 // pred_fallthru
          _
      $region44: #{tpu_custom_call.1} parent=5 // pred_fallthru
        _
    $region6: #{tpu_custom_call.1} parent=1 // loop_footer
      %s19 = sadd.s32 1, %s15
    $region7: #{tpu_custom_call.1} parent=1 // loop_footer_branch
      %14 = sbr.rel target = $region3
    $region8: #{tpu_custom_call.1} parent=1 // loop_exit
      _
    %467 = vsyncpa [#allocation3], 1
    %s468 = scalar_lea.sflag [#allocation3], 1
    %469 = vsyncpa %s468, 1
    %470 = vsyncpa [#allocation4], 1
    %s471 = scalar_lea.sflag [#allocation4], 1
    %472 = vsyncpa %s471, 1

</llo_original>
